<compile_context>
chip_gen: v6e
topology: v6e:2x2x1
jax: 0.10.0
libtpu: 0.0.40
codegen_flags: <defaults>
</compile_context>

<pallas_src>
import functools

import jax
import jax.numpy as jnp
from jax.experimental import pallas as pl
from jax.experimental.pallas import tpu as pltpu


# --------------------------------------------------------------------------
# Fused kernel: conv-matmul(+bias) + ReLU + BN(stats only) + FC + output linear
# --------------------------------------------------------------------------
def _fused_forward_kernel(cols_ref, cw_ref, pack_ref, fcw_hbm, out_ref,
                          fcw_vmem, fcw_sem, *, n_batch, hw, out_c, fc, out_dim, eps):
    # Kick off the fc_w HBM->VMEM DMA immediately; it overlaps conv + BN below.
    fcw_copy = pltpu.make_async_copy(fcw_hbm, fcw_vmem, fcw_sem)
    fcw_copy.start()

    # ---- Conv2d('same') as a lane-dense matmul; bias folded in via ones row ----
    # (OutC, C*KH*KW+1) @ (C*KH*KW+1, N*H*W) -> (OutC, N*H*W), f32 MXU accumulation.
    acc = jnp.dot(cw_ref[...], cols_ref[...], preferred_element_type=jnp.float32)
    acc = jnp.maximum(acc, 0.0)                                # ReLU

    # ---- BatchNorm2d (training-mode batch statistics). gamma/beta folded into FC. ----
    mean = jnp.mean(acc, axis=1, keepdims=True)                # per-channel mean
    diff = acc - mean
    var = jnp.mean(diff * diff, axis=1, keepdims=True)         # biased variance
    xhat = diff * jax.lax.rsqrt(var + eps)                     # (OutC, N*HW)

    # ---- Flatten (PyTorch order c*HW + hw) via lane-aligned slices + concats ----
    rows = [
        jnp.concatenate(
            [xhat[c:c + 1, n * hw:(n + 1) * hw] for c in range(out_c)], axis=1)
        for n in range(n_batch)
    ]
    flat = rows[0] if n_batch == 1 else jnp.concatenate(rows, axis=0)   # (N, C*HW)

    # ---- Linear(C*HW -> FC) + ReLU: single dot_general against lane-dense fc_w ----
    fcw_copy.wait()                                            # fc_w now resident in VMEM
    h = jax.lax.dot_general(flat, fcw_vmem[...],
                            (((1,), (1,)), ((), ())),
                            preferred_element_type=jnp.float32)          # (N, FC)
    h = jnp.maximum(h + pack_ref[fc + 1:fc + 2, :fc], 0.0)     # folded fc bias + ReLU

    # ---- Output Linear(FC -> OUT); weights/bias read from the packed operand ----
    out = jnp.dot(h, pack_ref[0:fc, 0:out_dim], preferred_element_type=jnp.float32)
    out = out + pack_ref[fc:fc + 1, 0:out_dim]
    out_ref[...] = out.astype(out_ref.dtype)


def neural_network_forward(x, p, eps=1e-5):
    """Fused forward pass of the NeuralNetwork module (single pallas_call)."""
    N, C, H, W = x.shape
    OutC, Cin, KH, KW = p["conv_w"].shape
    assert Cin == C
    HW = H * W
    NHW = N * HW
    K = C * KH * KW
    CHW = OutC * HW
    FC = p["fc_w"].shape[1]
    OUT = p["out_w"].shape[1]

    # ---- host-side im2col in the lane-dense layout the kernel consumes ----
    # cols[c*KH*KW + kh*KW + kw, n*HW + h*W + w] = x_padded[n, c, h+kh, w+kw]
    ph, pw = KH // 2, KW // 2
    xp = jnp.pad(x, ((0, 0), (0, 0), (ph, ph), (pw, pw)))
    patches = jnp.stack(
        [xp[:, :, i:i + H, j:j + W] for i in range(KH) for j in range(KW)], axis=2
    )  # (N, C, KH*KW, H, W)
    cols = jnp.transpose(patches, (1, 2, 0, 3, 4)).reshape(K, NHW).astype(jnp.float32)
    # Append a ones row so the conv bias rides the same matmul.
    cols_aug = jnp.concatenate([cols, jnp.ones((1, NHW), jnp.float32)], axis=0)

    cw = p["conv_w"].reshape(OutC, K).astype(jnp.float32)
    cw_aug = jnp.concatenate(
        [cw, p["conv_b"].reshape(OutC, 1).astype(jnp.float32)], axis=1)     # (OutC, K+1)

    # ---- fold BN gamma/beta into the FC weights/bias (host side, exact) ----
    fcw = p["fc_w"].astype(jnp.float32)                                     # (C*HW, FC)
    g = p["bn_g"].astype(jnp.float32)
    b = p["bn_b"].astype(jnp.float32)
    fcw_t = (fcw * jnp.repeat(g, HW)[:, None]).T                            # (FC, C*HW) lane-dense
    chan_sums = fcw.reshape(OutC, HW, FC).sum(axis=1)                       # (OutC, FC)
    fcb_fold = p["fc_b"].astype(jnp.float32) + b @ chan_sums                # (FC,)

    # ---- pack the small tail params into one operand ----
    #   rows [0, FC)  : out_w (cols [0, OUT))
    #   row  FC       : out_b (cols [0, OUT))
    #   row  FC + 1   : folded fc bias (cols [0, FC))
    pack = jnp.zeros((FC + 2, FC), jnp.float32)
    pack = pack.at[0:FC, 0:OUT].set(p["out_w"].astype(jnp.float32))
    pack = pack.at[FC, 0:OUT].set(p["out_b"].astype(jnp.float32))
    pack = pack.at[FC + 1, 0:FC].set(fcb_fold)

    flops = (2 * OutC * (K + 1) * NHW          # conv matmul (+bias)
             + 2 * N * CHW * FC                # fc matmul
             + 2 * N * FC * OUT                # output matmul
             + 6 * OutC * NHW)                 # relu / bn elementwise
    bytes_accessed = (cols_aug.size + cw_aug.size + pack.size + fcw_t.size + N * OUT) * 4

    kernel = functools.partial(
        _fused_forward_kernel,
        n_batch=N, hw=HW, out_c=OutC, fc=FC, out_dim=OUT, eps=eps)

    return pl.pallas_call(
        kernel,
        out_shape=jax.ShapeDtypeStruct((N, OUT), jnp.float32),
        grid=(1,),
        in_specs=[
            pl.BlockSpec(cols_aug.shape, lambda i: (0, 0)),
            pl.BlockSpec(cw_aug.shape, lambda i: (0, 0)),
            pl.BlockSpec(pack.shape, lambda i: (0, 0)),
            pl.BlockSpec(memory_space=pl.ANY),                 # fc_w: manual, overlapped DMA
        ],
        out_specs=pl.BlockSpec((N, OUT), lambda i: (0, 0)),
        scratch_shapes=[
            pltpu.VMEM((FC, CHW), jnp.float32),                # fc_w landing buffer
            pltpu.SemaphoreType.DMA,                           # its completion semaphore
        ],
        compiler_params=pltpu.CompilerParams(
            dimension_semantics=("arbitrary",),
            vmem_limit_bytes=32 * 1024 * 1024),
        cost_estimate=pl.CostEstimate(
            flops=flops, transcendentals=OutC, bytes_accessed=int(bytes_accessed)),
    )(cols_aug, cw_aug, pack, fcw_t)


# --------------------------------------------------------------------------
# NeuralNetwork instantiation implied by the spec:
#   Conv2d(4->8, 3x3, 'same') + ReLU -> BatchNorm2d(8) -> Flatten ->
#   Linear(2048->32) + ReLU -> Linear(32->10), input (4, 16, 16), output 10.
# --------------------------------------------------------------------------
def make_params():
    ks = jax.random.split(jax.random.PRNGKey(1), 8)
    return {
        "conv_w": 0.1 * jax.random.normal(ks[0], (8, 4, 3, 3), jnp.float32),
        "conv_b": 0.1 * jax.random.normal(ks[1], (8,), jnp.float32),
        "bn_g": 1.0 + 0.1 * jax.random.normal(ks[2], (8,), jnp.float32),
        "bn_b": 0.1 * jax.random.normal(ks[3], (8,), jnp.float32),
        "fc_w": 0.05 * jax.random.normal(ks[4], (8 * 16 * 16, 32), jnp.float32),
        "fc_b": 0.1 * jax.random.normal(ks[5], (32,), jnp.float32),
        "out_w": 0.1 * jax.random.normal(ks[6], (32, 10), jnp.float32),
        "out_b": 0.1 * jax.random.normal(ks[7], (10,), jnp.float32),
    }


def reference_forward(x, p, eps=1e-5):
    h = jax.lax.conv_general_dilated(
        x, p["conv_w"], window_strides=(1, 1), padding="SAME",
        dimension_numbers=("NCHW", "OIHW", "NCHW"))
    h = jnp.maximum(h + p["conv_b"][None, :, None, None], 0.0)
    mean = jnp.mean(h, axis=(0, 2, 3), keepdims=True)
    var = jnp.mean((h - mean) ** 2, axis=(0, 2, 3), keepdims=True)
    h = (h - mean) / jnp.sqrt(var + eps)
    h = h * p["bn_g"][None, :, None, None] + p["bn_b"][None, :, None, None]
    h = h.reshape(h.shape[0], -1)
    h = jnp.maximum(h @ p["fc_w"] + p["fc_b"], 0.0)
    return h @ p["out_w"] + p["out_b"]


if __name__ == "__main__":
    N, C, H, W = 2, 4, 16, 16
    x = jax.random.normal(jax.random.PRNGKey(0), (N, C, H, W), jnp.float32)
    params = make_params()

    y = jax.block_until_ready(jax.jit(neural_network_forward)(x, params))

    y_ref = reference_forward(x, params)
    assert y.shape == (N, 10), y.shape
    assert jnp.allclose(y, y_ref, atol=1e-4, rtol=1e-4), float(jnp.max(jnp.abs(y - y_ref)))

    print("KERNEL_OK")
</pallas_src>

<mosaic_0001>
module attributes {stable_mosaic.version = 11 : i64} {
  func.func @_fused_forward_kernel(%arg0: i32, %arg1: memref<37x512xf32, #tpu.memory_space<vmem>>, %arg2: memref<8x37xf32, #tpu.memory_space<vmem>>, %arg3: memref<34x32xf32, #tpu.memory_space<vmem>>, %arg4: memref<32x2048xf32, #tpu.memory_space<any>>, %arg5: memref<2x10xf32, #tpu.memory_space<vmem>>, %arg6: memref<32x2048xf32, #tpu.memory_space<vmem>>, %arg7: memref<!tpu.dma_semaphore, #tpu.memory_space<semaphore_mem>>) attributes {dimension_semantics = [#tpu.dimension_semantics<arbitrary>], iteration_bounds = array<i64: 1>, scalar_prefetch = 0 : i64, scratch_operands = 2 : i64, tpu.core_type = #tpu.core_type<tc>, window_params = [{pipeline_mode = #tpu.pipeline_mode<synchronous>, transform_indices = @transform_0, window_bounds = array<i64: 37, 512>}, {pipeline_mode = #tpu.pipeline_mode<synchronous>, transform_indices = @transform_1, window_bounds = array<i64: 8, 37>}, {pipeline_mode = #tpu.pipeline_mode<synchronous>, transform_indices = @transform_2, window_bounds = array<i64: 34, 32>}, {}, {pipeline_mode = #tpu.pipeline_mode<synchronous>, transform_indices = @transform_4, window_bounds = array<i64: 2, 10>}]} {
    tpu.enqueue_dma source(%arg4 : memref<32x2048xf32, #tpu.memory_space<any>>) target(%arg6 : memref<32x2048xf32, #tpu.memory_space<vmem>>) target_semaphore(%arg7 : memref<!tpu.dma_semaphore, #tpu.memory_space<semaphore_mem>>)
    %c0 = arith.constant 0 : index
    %c0_0 = arith.constant 0 : index
    %0 = vector.load %arg2[%c0, %c0_0] : memref<8x37xf32, #tpu.memory_space<vmem>>, vector<8x37xf32>
    %c0_1 = arith.constant 0 : index
    %c0_2 = arith.constant 0 : index
    %1 = vector.load %arg1[%c0_1, %c0_2] : memref<37x512xf32, #tpu.memory_space<vmem>>, vector<37x512xf32>
    %cst = arith.constant dense<0.000000e+00> : vector<8x512xf32>
    %2 = tpu.matmul %0, %1, %cst {dimension_numbers = #tpu.dot_dimension_numbers<[1], [0], [0], [1], [0, 0, 1, 1], [], []>} : vector<8x37xf32>, vector<37x512xf32>, vector<8x512xf32> -> vector<8x512xf32>
    %cst_3 = arith.constant 0.000000e+00 : f32
    %3 = vector.broadcast %cst_3 : f32 to vector<8x512xf32>
    %4 = arith.maximumf %2, %3 : vector<8x512xf32>
    %cst_4 = arith.constant dense<0.000000e+00> : vector<8xf32>
    %5 = vector.multi_reduction <add>, %4, %cst_4 [1] : vector<8x512xf32> to vector<8xf32>
    %6 = vector.shape_cast %5 : vector<8xf32> to vector<8x1xf32>
    %cst_5 = arith.constant 5.120000e+02 : f32
    %7 = vector.broadcast %cst_5 : f32 to vector<8x1xf32>
    %8 = arith.divf %6, %7 : vector<8x1xf32>
    %9 = vector.broadcast %8 : vector<8x1xf32> to vector<8x512xf32>
    %10 = arith.subf %4, %9 : vector<8x512xf32>
    %11 = arith.mulf %10, %10 : vector<8x512xf32>
    %cst_6 = arith.constant dense<0.000000e+00> : vector<8xf32>
    %12 = vector.multi_reduction <add>, %11, %cst_6 [1] : vector<8x512xf32> to vector<8xf32>
    %13 = vector.shape_cast %12 : vector<8xf32> to vector<8x1xf32>
    %cst_7 = arith.constant 5.120000e+02 : f32
    %14 = vector.broadcast %cst_7 : f32 to vector<8x1xf32>
    %15 = arith.divf %13, %14 : vector<8x1xf32>
    %cst_8 = arith.constant 9.99999974E-6 : f32
    %16 = vector.broadcast %cst_8 : f32 to vector<8x1xf32>
    %17 = arith.addf %15, %16 : vector<8x1xf32>
    %18 = math.rsqrt %17 : vector<8x1xf32>
    %19 = vector.broadcast %18 : vector<8x1xf32> to vector<8x512xf32>
    %20 = arith.mulf %10, %19 : vector<8x512xf32>
    %21 = vector.extract_strided_slice %20 {offsets = [0, 0], sizes = [1, 256], strides = [1, 1]} : vector<8x512xf32> to vector<1x256xf32>
    %22 = vector.extract_strided_slice %20 {offsets = [1, 0], sizes = [1, 256], strides = [1, 1]} : vector<8x512xf32> to vector<1x256xf32>
    %23 = vector.extract_strided_slice %20 {offsets = [2, 0], sizes = [1, 256], strides = [1, 1]} : vector<8x512xf32> to vector<1x256xf32>
    %24 = vector.extract_strided_slice %20 {offsets = [3, 0], sizes = [1, 256], strides = [1, 1]} : vector<8x512xf32> to vector<1x256xf32>
    %25 = vector.extract_strided_slice %20 {offsets = [4, 0], sizes = [1, 256], strides = [1, 1]} : vector<8x512xf32> to vector<1x256xf32>
    %26 = vector.extract_strided_slice %20 {offsets = [5, 0], sizes = [1, 256], strides = [1, 1]} : vector<8x512xf32> to vector<1x256xf32>
    %27 = vector.extract_strided_slice %20 {offsets = [6, 0], sizes = [1, 256], strides = [1, 1]} : vector<8x512xf32> to vector<1x256xf32>
    %28 = vector.extract_strided_slice %20 {offsets = [7, 0], sizes = [1, 256], strides = [1, 1]} : vector<8x512xf32> to vector<1x256xf32>
    %29 = tpu.concatenate %21, %22, %23, %24, %25, %26, %27, %28 in 1 : vector<1x256xf32>, vector<1x256xf32>, vector<1x256xf32>, vector<1x256xf32>, vector<1x256xf32>, vector<1x256xf32>, vector<1x256xf32>, vector<1x256xf32> -> vector<1x2048xf32>
    %30 = vector.extract_strided_slice %20 {offsets = [0, 256], sizes = [1, 256], strides = [1, 1]} : vector<8x512xf32> to vector<1x256xf32>
    %31 = vector.extract_strided_slice %20 {offsets = [1, 256], sizes = [1, 256], strides = [1, 1]} : vector<8x512xf32> to vector<1x256xf32>
    %32 = vector.extract_strided_slice %20 {offsets = [2, 256], sizes = [1, 256], strides = [1, 1]} : vector<8x512xf32> to vector<1x256xf32>
    %33 = vector.extract_strided_slice %20 {offsets = [3, 256], sizes = [1, 256], strides = [1, 1]} : vector<8x512xf32> to vector<1x256xf32>
    %34 = vector.extract_strided_slice %20 {offsets = [4, 256], sizes = [1, 256], strides = [1, 1]} : vector<8x512xf32> to vector<1x256xf32>
    %35 = vector.extract_strided_slice %20 {offsets = [5, 256], sizes = [1, 256], strides = [1, 1]} : vector<8x512xf32> to vector<1x256xf32>
    %36 = vector.extract_strided_slice %20 {offsets = [6, 256], sizes = [1, 256], strides = [1, 1]} : vector<8x512xf32> to vector<1x256xf32>
    %37 = vector.extract_strided_slice %20 {offsets = [7, 256], sizes = [1, 256], strides = [1, 1]} : vector<8x512xf32> to vector<1x256xf32>
    %38 = tpu.concatenate %30, %31, %32, %33, %34, %35, %36, %37 in 1 : vector<1x256xf32>, vector<1x256xf32>, vector<1x256xf32>, vector<1x256xf32>, vector<1x256xf32>, vector<1x256xf32>, vector<1x256xf32>, vector<1x256xf32> -> vector<1x2048xf32>
    %39 = tpu.concatenate %29, %38 in 0 : vector<1x2048xf32>, vector<1x2048xf32> -> vector<2x2048xf32>
    tpu.wait_dma2 semaphore(%arg7 : memref<!tpu.dma_semaphore, #tpu.memory_space<semaphore_mem>>) src(%arg4 : memref<32x2048xf32, #tpu.memory_space<any>>) dst(%arg6 : memref<32x2048xf32, #tpu.memory_space<vmem>>)
    %c0_9 = arith.constant 0 : index
    %c0_10 = arith.constant 0 : index
    %40 = vector.load %arg6[%c0_9, %c0_10] : memref<32x2048xf32, #tpu.memory_space<vmem>>, vector<32x2048xf32>
    %cst_11 = arith.constant dense<0.000000e+00> : vector<2x32xf32>
    %41 = tpu.matmul %39, %40, %cst_11 {dimension_numbers = #tpu.dot_dimension_numbers<[1], [1], [0], [0], [0, 0, 1, 0], [], []>} : vector<2x2048xf32>, vector<32x2048xf32>, vector<2x32xf32> -> vector<2x32xf32>
    %c33 = arith.constant 33 : index
    %c0_12 = arith.constant 0 : index
    %42 = vector.load %arg3[%c33, %c0_12] : memref<34x32xf32, #tpu.memory_space<vmem>>, vector<1x32xf32>
    %43 = vector.broadcast %42 : vector<1x32xf32> to vector<2x32xf32>
    %44 = arith.addf %41, %43 : vector<2x32xf32>
    %cst_13 = arith.constant 0.000000e+00 : f32
    %45 = vector.broadcast %cst_13 : f32 to vector<2x32xf32>
    %46 = arith.maximumf %44, %45 : vector<2x32xf32>
    %c0_14 = arith.constant 0 : index
    %c0_15 = arith.constant 0 : index
    %47 = vector.load %arg3[%c0_14, %c0_15] : memref<34x32xf32, #tpu.memory_space<vmem>>, vector<32x10xf32>
    %cst_16 = arith.constant dense<0.000000e+00> : vector<2x10xf32>
    %48 = tpu.matmul %46, %47, %cst_16 {dimension_numbers = #tpu.dot_dimension_numbers<[1], [0], [0], [1], [0, 0, 1, 1], [], []>} : vector<2x32xf32>, vector<32x10xf32>, vector<2x10xf32> -> vector<2x10xf32>
    %c32 = arith.constant 32 : index
    %c0_17 = arith.constant 0 : index
    %49 = vector.load %arg3[%c32, %c0_17] : memref<34x32xf32, #tpu.memory_space<vmem>>, vector<1x10xf32>
    %50 = vector.broadcast %49 : vector<1x10xf32> to vector<2x10xf32>
    %51 = arith.addf %48, %50 : vector<2x10xf32>
    %c0_18 = arith.constant 0 : index
    %c0_19 = arith.constant 0 : index
    %52 = vector.load %arg5[%c0_18, %c0_19] : memref<2x10xf32, #tpu.memory_space<vmem>>, vector<2x10xf32>
    tpu.vector_store %arg5[%c0_18, %c0_19], %51 {strides = array<i32>} : memref<2x10xf32, #tpu.memory_space<vmem>>, vector<2x10xf32>,
    return
  }
  func.func @transform_0(%arg0: i32) -> (i32, i32) {
    %c0_i32 = arith.constant 0 : i32
    %c0_i32_0 = arith.constant 0 : i32
    %c0_i32_1 = arith.constant 0 : i32
    return %c0_i32, %c0_i32_0 : i32, i32
  }
  func.func @transform_1(%arg0: i32) -> (i32, i32) {
    %c0_i32 = arith.constant 0 : i32
    %c0_i32_0 = arith.constant 0 : i32
    %c0_i32_1 = arith.constant 0 : i32
    return %c0_i32, %c0_i32_0 : i32, i32
  }
  func.func @transform_2(%arg0: i32) -> (i32, i32) {
    %c0_i32 = arith.constant 0 : i32
    %c0_i32_0 = arith.constant 0 : i32
    %c0_i32_1 = arith.constant 0 : i32
    return %c0_i32, %c0_i32_0 : i32, i32
  }
  func.func @transform_4(%arg0: i32) -> (i32, i32) {
    %c0_i32 = arith.constant 0 : i32
    %c0_i32_0 = arith.constant 0 : i32
    %c0_i32_1 = arith.constant 0 : i32
    return %c0_i32, %c0_i32_0 : i32, i32
  }
}

</mosaic_0001>

<llo_original>
// kernel: neural_network_forward.1
$region0: #{neural_network_forward.1}
  #allocation0 [shape = 'u32[]', space=smem, size = 0x4, offset = 0x4, fixed_abs, tag = 'smem constant byte address 0x4 - core index']
  #allocation1 [shape = 'u32[144,128]{1,0:T(1,128)}', space=vmem, size = 0x12000, scoped, tag = 'internal scratch']
  #allocation2 [shape = 'f32[32,2048]{1,0:T(8,128)}', space=vmem, size = 0x40000, scoped, tag = 'scratch operand']
  #allocation3 [shape = 's32[1]{0}', space=sflag, size = 0x4, scoped, tag = 'scratch operand']
  #allocation6 [shape = 's32[]', space=sflag, size = 0x4, offset = 0, fixed_abs, tag = 'sflag constant byte address 0x0 - dummy sync flag']
  %s0 = inlined_call_operand.vmem [shape: f32[37,512], index: 0, kind: input, shape index: {}]
  %s1 = inlined_call_operand.vmem [shape: f32[8,37], index: 1, kind: input, shape index: {}]
  %s2 = inlined_call_operand.vmem [shape: f32[34,32], index: 2, kind: input, shape index: {}]
  %s3 = inlined_call_operand.vmem [shape: f32[32,2048], index: 3, kind: input, shape index: {}]
  %s4 = inlined_call_operand.hbm [shape: f32[2,10], index: 4, kind: output, shape index: {}]
  %s5 = sld [smem:[#allocation0]]
  $region56: #{neural_network_forward.1} parent=0
    _
  %s7 = ssub.s32 1, %s5
  %s8 = scalar_select 0, %s7, %s5
  $region1: #{neural_network_forward.1} parent=0
    #allocation4 [shape = 'u8[1024]{0}', space=vmem, size = 0x400, scoped, tag = 'output window, operand 0, single buffered']
    #allocation5 [shape = 's32[1]{0}', space=sflag, size = 0x4, scoped, tag = 'scoped memory for neural_network_forward.1']
    %9 = vsyncpa [#allocation5], 0
    // Predicated region
    $region2: #{neural_network_forward.1} parent=1 // pred_check
      _
    $region3: #{neural_network_forward.1} parent=1 // pred_check_branch
      %11 = sbr.rel (0) target = $region5
    $region4: #{neural_network_forward.1} parent=1 // pred_region
      _
    $region5: #{neural_network_forward.1} parent=1 // pred_fallthru
      _
    // Predicated region
    $region6: #{neural_network_forward.1} parent=1 // pred_check
      _
    $region7: #{neural_network_forward.1} parent=1 // pred_check_branch
      %13 = sbr.rel (0) target = $region9
    $region8: #{neural_network_forward.1} parent=1 // pred_region
      _
    $region9: #{neural_network_forward.1} parent=1 // pred_fallthru
      _
    // Predicated region
    $region10: #{neural_network_forward.1} parent=1 // pred_check
      _
    $region11: #{neural_network_forward.1} parent=1 // pred_check_branch
      %15 = sbr.rel (0) target = $region13
    $region12: #{neural_network_forward.1} parent=1 // pred_region
      _
    $region13: #{neural_network_forward.1} parent=1 // pred_fallthru
      _
    %p17 = scmp.lt.u32.totalorder 512, 8
    %p18 = pneg %p17
    // Predicated region
    $region14: #{neural_network_forward.1} parent=1 // pred_check
      _
    $region15: #{neural_network_forward.1} parent=1 // pred_check_branch
      %20 = sbr.rel (%p17) target = $region17
    $region16: #{neural_network_forward.1} parent=1 // pred_region
      %s36 = sand.u32 512, 7
      %p37 = scmp.eq.s32.totalorder %s36, 0
      // Predicated region
      $region29: #{neural_network_forward.1} parent=16 // pred_check
        %p38 = pneg %p37
      $region30: #{neural_network_forward.1} parent=16 // pred_check_branch
        %40 = sbr.rel (%p38) target = $region32
      $region31: #{neural_network_forward.1} parent=16 // pred_region
        loop: start=0, step=1, limit=1
        $region33: #{neural_network_forward.1} parent=31 // loop_pre_header
          _
        $region34: #{neural_network_forward.1} parent=31 // loop_header
          %s42 = sphi 0, %s46
          %p43 = scmp.ge.s32.totalorder %s42, 1
          %s47 = sphi %s3, %s3
          %s48 = sphi [#allocation2], [#allocation2]
        $region35: #{neural_network_forward.1} parent=31 // loop_header_branch
          %45 = sbr.rel (%p43) target = $region39
        $region36: #{neural_network_forward.1} parent=31 // loop_body
          %v49 = vld [vmem:[%s47] sm:$0xff]
          %50 = vst [vmem:[%s48] sm:$0xff] %v49
          %v51 = vld [vmem:[%s47 + $0x8] sm:$0xff]
          %52 = vst [vmem:[%s48 + $0x8] sm:$0xff] %v51
          %v53 = vld [vmem:[%s47 + $0x10] sm:$0xff]
          %54 = vst [vmem:[%s48 + $0x10] sm:$0xff] %v53
          %v55 = vld [vmem:[%s47 + $0x18] sm:$0xff]
          %56 = vst [vmem:[%s48 + $0x18] sm:$0xff] %v55
          %v57 = vld [vmem:[%s47 + $0x20] sm:$0xff]
          %58 = vst [vmem:[%s48 + $0x20] sm:$0xff] %v57
          %v59 = vld [vmem:[%s47 + $0x28] sm:$0xff]
          %60 = vst [vmem:[%s48 + $0x28] sm:$0xff] %v59
          %v61 = vld [vmem:[%s47 + $0x30] sm:$0xff]
          %62 = vst [vmem:[%s48 + $0x30] sm:$0xff] %v61
          %v63 = vld [vmem:[%s47 + $0x38] sm:$0xff]
          %64 = vst [vmem:[%s48 + $0x38] sm:$0xff] %v63
          %v65 = vld [vmem:[%s47 + $0x40] sm:$0xff]
          %66 = vst [vmem:[%s48 + $0x40] sm:$0xff] %v65
          %v67 = vld [vmem:[%s47 + $0x48] sm:$0xff]
          %68 = vst [vmem:[%s48 + $0x48] sm:$0xff] %v67
          %v69 = vld [vmem:[%s47 + $0x50] sm:$0xff]
          %70 = vst [vmem:[%s48 + $0x50] sm:$0xff] %v69
          %v71 = vld [vmem:[%s47 + $0x58] sm:$0xff]
          %72 = vst [vmem:[%s48 + $0x58] sm:$0xff] %v71
          %v73 = vld [vmem:[%s47 + $0x60] sm:$0xff]
          %74 = vst [vmem:[%s48 + $0x60] sm:$0xff] %v73
          %v75 = vld [vmem:[%s47 + $0x68] sm:$0xff]
          %76 = vst [vmem:[%s48 + $0x68] sm:$0xff] %v75
          %v77 = vld [vmem:[%s47 + $0x70] sm:$0xff]
          %78 = vst [vmem:[%s48 + $0x70] sm:$0xff] %v77
          %v79 = vld [vmem:[%s47 + $0x78] sm:$0xff]
          %80 = vst [vmem:[%s48 + $0x78] sm:$0xff] %v79
          %v81 = vld [vmem:[%s47 + $0x80] sm:$0xff]
          %82 = vst [vmem:[%s48 + $0x80] sm:$0xff] %v81
          %v83 = vld [vmem:[%s47 + $0x88] sm:$0xff]
          %84 = vst [vmem:[%s48 + $0x88] sm:$0xff] %v83
          %v85 = vld [vmem:[%s47 + $0x90] sm:$0xff]
          %86 = vst [vmem:[%s48 + $0x90] sm:$0xff] %v85
          %v87 = vld [vmem:[%s47 + $0x98] sm:$0xff]
          %88 = vst [vmem:[%s48 + $0x98] sm:$0xff] %v87
          %v89 = vld [vmem:[%s47 + $0xa0] sm:$0xff]
          %90 = vst [vmem:[%s48 + $0xa0] sm:$0xff] %v89
          %v91 = vld [vmem:[%s47 + $0xa8] sm:$0xff]
          %92 = vst [vmem:[%s48 + $0xa8] sm:$0xff] %v91
          %v93 = vld [vmem:[%s47 + $0xb0] sm:$0xff]
          %94 = vst [vmem:[%s48 + $0xb0] sm:$0xff] %v93
          %v95 = vld [vmem:[%s47 + $0xb8] sm:$0xff]
          %96 = vst [vmem:[%s48 + $0xb8] sm:$0xff] %v95
          %v97 = vld [vmem:[%s47 + $0xc0] sm:$0xff]
          %98 = vst [vmem:[%s48 + $0xc0] sm:$0xff] %v97
          %v99 = vld [vmem:[%s47 + $0xc8] sm:$0xff]
          %100 = vst [vmem:[%s48 + $0xc8] sm:$0xff] %v99
          %v101 = vld [vmem:[%s47 + $0xd0] sm:$0xff]
          %102 = vst [vmem:[%s48 + $0xd0] sm:$0xff] %v101
          %v103 = vld [vmem:[%s47 + $0xd8] sm:$0xff]
          %104 = vst [vmem:[%s48 + $0xd8] sm:$0xff] %v103
          %v105 = vld [vmem:[%s47 + $0xe0] sm:$0xff]
          %106 = vst [vmem:[%s48 + $0xe0] sm:$0xff] %v105
          %v107 = vld [vmem:[%s47 + $0xe8] sm:$0xff]
          %108 = vst [vmem:[%s48 + $0xe8] sm:$0xff] %v107
          %v109 = vld [vmem:[%s47 + $0xf0] sm:$0xff]
          %110 = vst [vmem:[%s48 + $0xf0] sm:$0xff] %v109
          %v111 = vld [vmem:[%s47 + $0xf8] sm:$0xff]
          %112 = vst [vmem:[%s48 + $0xf8] sm:$0xff] %v111
          %v113 = vld [vmem:[%s47 + $0x100] sm:$0xff]
          %114 = vst [vmem:[%s48 + $0x100] sm:$0xff] %v113
          %v115 = vld [vmem:[%s47 + $0x108] sm:$0xff]
          %116 = vst [vmem:[%s48 + $0x108] sm:$0xff] %v115
          %v117 = vld [vmem:[%s47 + $0x110] sm:$0xff]
          %118 = vst [vmem:[%s48 + $0x110] sm:$0xff] %v117
          %v119 = vld [vmem:[%s47 + $0x118] sm:$0xff]
          %120 = vst [vmem:[%s48 + $0x118] sm:$0xff] %v119
          %v121 = vld [vmem:[%s47 + $0x120] sm:$0xff]
          %122 = vst [vmem:[%s48 + $0x120] sm:$0xff] %v121
          %v123 = vld [vmem:[%s47 + $0x128] sm:$0xff]
          %124 = vst [vmem:[%s48 + $0x128] sm:$0xff] %v123
          %v125 = vld [vmem:[%s47 + $0x130] sm:$0xff]
          %126 = vst [vmem:[%s48 + $0x130] sm:$0xff] %v125
          %v127 = vld [vmem:[%s47 + $0x138] sm:$0xff]
          %128 = vst [vmem:[%s48 + $0x138] sm:$0xff] %v127
          %v129 = vld [vmem:[%s47 + $0x140] sm:$0xff]
          %130 = vst [vmem:[%s48 + $0x140] sm:$0xff] %v129
          %v131 = vld [vmem:[%s47 + $0x148] sm:$0xff]
          %132 = vst [vmem:[%s48 + $0x148] sm:$0xff] %v131
          %v133 = vld [vmem:[%s47 + $0x150] sm:$0xff]
          %134 = vst [vmem:[%s48 + $0x150] sm:$0xff] %v133
          %v135 = vld [vmem:[%s47 + $0x158] sm:$0xff]
          %136 = vst [vmem:[%s48 + $0x158] sm:$0xff] %v135
          %v137 = vld [vmem:[%s47 + $0x160] sm:$0xff]
          %138 = vst [vmem:[%s48 + $0x160] sm:$0xff] %v137
          %v139 = vld [vmem:[%s47 + $0x168] sm:$0xff]
          %140 = vst [vmem:[%s48 + $0x168] sm:$0xff] %v139
          %v141 = vld [vmem:[%s47 + $0x170] sm:$0xff]
          %142 = vst [vmem:[%s48 + $0x170] sm:$0xff] %v141
          %v143 = vld [vmem:[%s47 + $0x178] sm:$0xff]
          %144 = vst [vmem:[%s48 + $0x178] sm:$0xff] %v143
          %v145 = vld [vmem:[%s47 + $0x180] sm:$0xff]
          %146 = vst [vmem:[%s48 + $0x180] sm:$0xff] %v145
          %v147 = vld [vmem:[%s47 + $0x188] sm:$0xff]
          %148 = vst [vmem:[%s48 + $0x188] sm:$0xff] %v147
          %v149 = vld [vmem:[%s47 + $0x190] sm:$0xff]
          %150 = vst [vmem:[%s48 + $0x190] sm:$0xff] %v149
          %v151 = vld [vmem:[%s47 + $0x198] sm:$0xff]
          %152 = vst [vmem:[%s48 + $0x198] sm:$0xff] %v151
          %v153 = vld [vmem:[%s47 + $0x1a0] sm:$0xff]
          %154 = vst [vmem:[%s48 + $0x1a0] sm:$0xff] %v153
          %v155 = vld [vmem:[%s47 + $0x1a8] sm:$0xff]
          %156 = vst [vmem:[%s48 + $0x1a8] sm:$0xff] %v155
          %v157 = vld [vmem:[%s47 + $0x1b0] sm:$0xff]
          %158 = vst [vmem:[%s48 + $0x1b0] sm:$0xff] %v157
          %v159 = vld [vmem:[%s47 + $0x1b8] sm:$0xff]
          %160 = vst [vmem:[%s48 + $0x1b8] sm:$0xff] %v159
          %v161 = vld [vmem:[%s47 + $0x1c0] sm:$0xff]
          %162 = vst [vmem:[%s48 + $0x1c0] sm:$0xff] %v161
          %v163 = vld [vmem:[%s47 + $0x1c8] sm:$0xff]
          %164 = vst [vmem:[%s48 + $0x1c8] sm:$0xff] %v163
          %v165 = vld [vmem:[%s47 + $0x1d0] sm:$0xff]
          %166 = vst [vmem:[%s48 + $0x1d0] sm:$0xff] %v165
          %v167 = vld [vmem:[%s47 + $0x1d8] sm:$0xff]
          %168 = vst [vmem:[%s48 + $0x1d8] sm:$0xff] %v167
          %v169 = vld [vmem:[%s47 + $0x1e0] sm:$0xff]
          %170 = vst [vmem:[%s48 + $0x1e0] sm:$0xff] %v169
          %v171 = vld [vmem:[%s47 + $0x1e8] sm:$0xff]
          %172 = vst [vmem:[%s48 + $0x1e8] sm:$0xff] %v171
          %v173 = vld [vmem:[%s47 + $0x1f0] sm:$0xff]
          %174 = vst [vmem:[%s48 + $0x1f0] sm:$0xff] %v173
          %v175 = vld [vmem:[%s47 + $0x1f8] sm:$0xff]
          %176 = vst [vmem:[%s48 + $0x1f8] sm:$0xff] %v175
        $region37: #{neural_network_forward.1} parent=31 // loop_footer
          %s46 = sadd.s32 1, %s42
        $region38: #{neural_network_forward.1} parent=31 // loop_footer_branch
          %41 = sbr.rel target = $region34
        $region39: #{neural_network_forward.1} parent=31 // loop_exit
          _
      $region32: #{neural_network_forward.1} parent=16 // pred_fallthru
        _
      %p177 = pneg %p37
      // Predicated region
      $region40: #{neural_network_forward.1} parent=16 // pred_check
        _
      $region41: #{neural_network_forward.1} parent=16 // pred_check_branch
        %179 = sbr.rel (%p37) target = $region43
      $region42: #{neural_network_forward.1} parent=16 // pred_region
        %s180 = sand.u32 512, 7
      $region43: #{neural_network_forward.1} parent=16 // pred_fallthru
        _
    $region17: #{neural_network_forward.1} parent=1 // pred_fallthru
      _
    // Predicated region
    $region18: #{neural_network_forward.1} parent=1 // pred_check
      %p21 = pneg %p17
    $region19: #{neural_network_forward.1} parent=1 // pred_check_branch
      %23 = sbr.rel (%p21) target = $region21
    $region20: #{neural_network_forward.1} parent=1 // pred_region
      %s24 = sshll.u32 1, 512
      %s25 = ssub.s32 %s24, 1
      loop: start=0, step=1, limit=1
      $region22: #{neural_network_forward.1} parent=20 // loop_pre_header
        _
      $region23: #{neural_network_forward.1} parent=20 // loop_header
        %s27 = sphi 0, %s31
        %p28 = scmp.ge.s32.totalorder %s27, 1
        %s32 = sphi %s3, %s3
        %s33 = sphi [#allocation2], [#allocation2]
      $region24: #{neural_network_forward.1} parent=20 // loop_header_branch
        %30 = sbr.rel (%p28) target = $region28
      $region25: #{neural_network_forward.1} parent=20 // loop_body
        %v34 = vld [vmem:[%s32] sm:%s25]
        %35 = vst [vmem:[%s33] sm:%s25] %v34
      $region26: #{neural_network_forward.1} parent=20 // loop_footer
        %s31 = sadd.s32 1, %s27
      $region27: #{neural_network_forward.1} parent=20 // loop_footer_branch
        %26 = sbr.rel target = $region23
      $region28: #{neural_network_forward.1} parent=20 // loop_exit
        _
    $region21: #{neural_network_forward.1} parent=1 // pred_fallthru
      _
    // Predicated region
    $region44: #{neural_network_forward.1} parent=1 // pred_check
      _
    $region45: #{neural_network_forward.1} parent=1 // pred_check_branch
      %183 = sbr.rel (0) target = $region47
    $region46: #{neural_network_forward.1} parent=1 // pred_region
      %184 = vsyncadd [#allocation3], 8192
    $region47: #{neural_network_forward.1} parent=1 // pred_fallthru
      _
    %v185 = vld [vmem:[%s1] sm:$0xff]
    %v186 = vld [vmem:[%s0] sm:$0xff]
    %v187 = vld [vmem:[%s0 + $0x8] sm:$0xff]
    %v188 = vld [vmem:[%s0 + $0x10] sm:$0xff]
    %v189 = vld [vmem:[%s0 + $0x18] sm:$0xff]
    %v190 = vld [vmem:[%s0 + $0x20] sm:$0xff]
    %v191 = vld [vmem:[%s0 + $0x28] sm:$0xff]
    %v192 = vld [vmem:[%s0 + $0x30] sm:$0xff]
    %v193 = vld [vmem:[%s0 + $0x38] sm:$0xff]
    %v194 = vld [vmem:[%s0 + $0x40] sm:$0xff]
    %v195 = vld [vmem:[%s0 + $0x48] sm:$0xff]
    %v196 = vld [vmem:[%s0 + $0x50] sm:$0xff]
    %v197 = vld [vmem:[%s0 + $0x58] sm:$0xff]
    %v198 = vld [vmem:[%s0 + $0x60] sm:$0xff]
    %v199 = vld [vmem:[%s0 + $0x68] sm:$0xff]
    %v200 = vld [vmem:[%s0 + $0x70] sm:$0xff]
    %v201 = vld [vmem:[%s0 + $0x78] sm:$0xff]
    %v202 = vld [vmem:[%s0 + $0x80] sm:$0x1f]
    %v203 = vld [vmem:[%s0 + $0x88] sm:$0x1f]
    %v204 = vld [vmem:[%s0 + $0x90] sm:$0x1f]
    %v205 = vld [vmem:[%s0 + $0x98] sm:$0x1f]
    %vm206 = vcmask 302080
    %v208 = vsel %vm206, %v185, 0
    %vm210 = vcmask 1044480
    %v212 = vsel %vm210, %v202, 0
    %v215 = vsel %vm210, %v203, 0
    %v218 = vsel %vm210, %v204, 0
    %v221 = vsel %vm210, %v205, 0
    %223 = vmatprep.subr.mxu0 0.0
    %224 = vmatpush1.msra.mxu0 0.0
    %225 = vmatprep.subr.mxu0 0.0
    %226 = vmatpush1.msra.mxu0 0.0
    %227 = vmatprep.subr.mxu0 0.0
    %228 = vmatpush1.msra.mxu0 0.0
    %229 = vmatprep.subr.mxu0 0.0
    %230 = vmatpush1.msra.mxu0 0.0
    %231 = vmatprep.subr.mxu0 0.0
    %232 = vmatpush1.msra.mxu0 0.0
    %233 = vmatprep.subr.mxu0 0.0
    %234 = vmatpush1.msra.mxu0 0.0
    %235 = vmatprep.subr.mxu0 0.0
    %236 = vmatpush1.msra.mxu0 0.0
    %237 = vmatprep.subr.mxu0 0.0
    %238 = vmatpush1.msra.mxu0 0.0
    %239 = vmatprep.subr.mxu0 0.0
    %240 = vmatpush1.msra.mxu0 0.0
    %241 = vmatprep.subr.mxu0 0.0
    %242 = vmatpush1.msra.mxu0 0.0
    %243 = vmatprep.subr.mxu0 0.0
    %244 = vmatpush1.msra.mxu0 0.0
    %245 = vmatprep.subr.mxu0 %v215
    %246 = vmatpush1.msra.mxu0 %v212
    %247 = vmatprep.subr.mxu0 %v199
    %248 = vmatpush1.msra.mxu0 %v198
    %249 = vmatprep.subr.mxu0 %v195
    %250 = vmatpush1.msra.mxu0 %v194
    %251 = vmatprep.subr.mxu0 %v191
    %252 = vmatpush1.msra.mxu0 %v190
    %253 = vmatprep.subr.mxu0 %v187
    %254 = vmatpush1.msra.mxu0 %v186
    %255 = vmatprep.subr.mxu0 0.0
    %256 = vmatpush2.msra.mxu0 0.0
    %257 = vmatprep.subr.mxu0 0.0
    %258 = vmatpush2.msra.mxu0 0.0
    %259 = vmatprep.subr.mxu0 0.0
    %260 = vmatpush2.msra.mxu0 0.0
    %261 = vmatprep.subr.mxu0 0.0
    %262 = vmatpush2.msra.mxu0 0.0
    %263 = vmatprep.subr.mxu0 0.0
    %264 = vmatpush2.msra.mxu0 0.0
    %265 = vmatprep.subr.mxu0 0.0
    %266 = vmatpush2.msra.mxu0 0.0
    %267 = vmatprep.subr.mxu0 0.0
    %268 = vmatpush2.msra.mxu0 0.0
    %269 = vmatprep.subr.mxu0 0.0
    %270 = vmatpush2.msra.mxu0 0.0
    %271 = vmatprep.subr.mxu0 0.0
    %272 = vmatpush2.msra.mxu0 0.0
    %273 = vmatprep.subr.mxu0 0.0
    %274 = vmatpush2.msra.mxu0 0.0
    %275 = vmatprep.subr.mxu0 0.0
    %276 = vmatpush2.msra.mxu0 0.0
    %277 = vmatprep.subr.mxu0 0.0
    %278 = vmatpush2.msra.mxu0 0.0
    %279 = vmatprep.subr.mxu0 0.0
    %280 = vmatpush2.msra.mxu0 0.0
    %281 = vmatprep.subr.mxu0 0.0
    %282 = vmatpush2.msra.mxu0 0.0
    %283 = vmatprep.subr.mxu0 0.0
    %284 = vmatpush2.msra.mxu0 0.0
    %285 = vmatprep.subr.mxu0 0.0
    %286 = vmatpush2.msra.mxu0 0.0
    %287 = vmatprep.mubr.f32.mxu0 0.0
    %288 = vmatmul.mubr.f32.gmra.mxu0 %v208
    %v289 = vpop.f32.mrf.mxu0
    %v290 = vadd.f32 0.0, %v289
    %v291 = vpop.f32.mrf.mxu0
    %v292 = vadd.f32 0.0, %v291
    %293 = vdwg.mxu0
    %294 = vmatprep.subr.mxu0 0.0
    %295 = vmatpush1.msra.mxu0 0.0
    %296 = vmatprep.subr.mxu0 0.0
    %297 = vmatpush1.msra.mxu0 0.0
    %298 = vmatprep.subr.mxu0 0.0
    %299 = vmatpush1.msra.mxu0 0.0
    %300 = vmatprep.subr.mxu0 0.0
    %301 = vmatpush1.msra.mxu0 0.0
    %302 = vmatprep.subr.mxu0 0.0
    %303 = vmatpush1.msra.mxu0 0.0
    %304 = vmatprep.subr.mxu0 0.0
    %305 = vmatpush1.msra.mxu0 0.0
    %306 = vmatprep.subr.mxu0 0.0
    %307 = vmatpush1.msra.mxu0 0.0
    %308 = vmatprep.subr.mxu0 0.0
    %309 = vmatpush1.msra.mxu0 0.0
    %310 = vmatprep.subr.mxu0 0.0
    %311 = vmatpush1.msra.mxu0 0.0
    %312 = vmatprep.subr.mxu0 0.0
    %313 = vmatpush1.msra.mxu0 0.0
    %314 = vmatprep.subr.mxu0 0.0
    %315 = vmatpush1.msra.mxu0 0.0
    %316 = vmatprep.subr.mxu0 %v221
    %317 = vmatpush1.msra.mxu0 %v218
    %318 = vmatprep.subr.mxu0 %v201
    %319 = vmatpush1.msra.mxu0 %v200
    %320 = vmatprep.subr.mxu0 %v197
    %321 = vmatpush1.msra.mxu0 %v196
    %322 = vmatprep.subr.mxu0 %v193
    %323 = vmatpush1.msra.mxu0 %v192
    %324 = vmatprep.subr.mxu0 %v189
    %325 = vmatpush1.msra.mxu0 %v188
    %326 = vmatprep.subr.mxu0 0.0
    %327 = vmatpush2.msra.mxu0 0.0
    %328 = vmatprep.subr.mxu0 0.0
    %329 = vmatpush2.msra.mxu0 0.0
    %330 = vmatprep.subr.mxu0 0.0
    %331 = vmatpush2.msra.mxu0 0.0
    %332 = vmatprep.subr.mxu0 0.0
    %333 = vmatpush2.msra.mxu0 0.0
    %334 = vmatprep.subr.mxu0 0.0
    %335 = vmatpush2.msra.mxu0 0.0
    %336 = vmatprep.subr.mxu0 0.0
    %337 = vmatpush2.msra.mxu0 0.0
    %338 = vmatprep.subr.mxu0 0.0
    %339 = vmatpush2.msra.mxu0 0.0
    %340 = vmatprep.subr.mxu0 0.0
    %341 = vmatpush2.msra.mxu0 0.0
    %342 = vmatprep.subr.mxu0 0.0
    %343 = vmatpush2.msra.mxu0 0.0
    %344 = vmatprep.subr.mxu0 0.0
    %345 = vmatpush2.msra.mxu0 0.0
    %346 = vmatprep.subr.mxu0 0.0
    %347 = vmatpush2.msra.mxu0 0.0
    %348 = vmatprep.subr.mxu0 0.0
    %349 = vmatpush2.msra.mxu0 0.0
    %350 = vmatprep.subr.mxu0 0.0
    %351 = vmatpush2.msra.mxu0 0.0
    %352 = vmatprep.subr.mxu0 0.0
    %353 = vmatpush2.msra.mxu0 0.0
    %354 = vmatprep.subr.mxu0 0.0
    %355 = vmatpush2.msra.mxu0 0.0
    %356 = vmatprep.subr.mxu0 0.0
    %357 = vmatpush2.msra.mxu0 0.0
    %358 = vmatprep.mubr.f32.mxu0 0.0
    %359 = vmatmul.mubr.f32.gmra.mxu0 %v208
    %v360 = vpop.f32.mrf.mxu0
    %v361 = vadd.f32 0.0, %v360
    %v362 = vpop.f32.mrf.mxu0
    %v363 = vadd.f32 0.0, %v362
    %364 = vdwg.mxu0
    %v365 = vmax.f32 %v290, 0.0
    %v366 = vmax.f32 %v292, 0.0
    %v367 = vmax.f32 %v361, 0.0
    %v368 = vmax.f32 %v363, 0.0
    %v369 = vadd.f32 %v365, %v366
    %v370 = vadd.f32 %v369, %v367
    %v371 = vadd.f32 %v370, %v368
    %372 = vadd.xlane.f32.xlu0 %v371
    %v373 = vpop.xlane.xlu0 %372
    %v374 = vrcp.pop 512.0
    %v375 = vmul.f32 %v373, %v374
    %v376 = vsub.f32 %v365, %v375
    %v377 = vsub.f32 %v366, %v375
    %v378 = vsub.f32 %v367, %v375
    %v379 = vsub.f32 %v368, %v375
    %v380 = vmul.f32 %v376, %v376
    %v381 = vmul.f32 %v377, %v377
    %v382 = vmul.f32 %v378, %v378
    %v383 = vmul.f32 %v379, %v379
    %v384 = vadd.f32 %v380, %v381
    %v385 = vadd.f32 %v384, %v382
    %v386 = vadd.f32 %v385, %v383
    %387 = vadd.xlane.f32.xlu0 %v386
    %v388 = vpop.xlane.xlu0 %387
    %v389 = vmul.f32 %v388, %v374
    %v390 = vadd.f32 %v389, 1e-05
    %v391 = vrsqrt.pop %v390
    %v392 = vmul.f32 %v376, %v391
    %v393 = vmul.f32 %v377, %v391
    %v394 = vmul.f32 %v378, %v391
    %v395 = vmul.f32 %v379, %v391
    %v398 = vrot.slane %v392, 1
    %v399 = vrot.slane %v393, 1
    %v402 = vrot.slane %v392, 2
    %v403 = vrot.slane %v393, 2
    %v406 = vrot.slane %v392, 3
    %v407 = vrot.slane %v393, 3
    %v410 = vrot.slane %v392, 4
    %v411 = vrot.slane %v393, 4
    %v414 = vrot.slane %v392, 5
    %v415 = vrot.slane %v393, 5
    %v418 = vrot.slane %v392, 6
    %v419 = vrot.slane %v393, 6
    %v422 = vrot.slane %v392, 7
    %v423 = vrot.slane %v393, 7
    %v428 = vrot.slane %v394, 1
    %v429 = vrot.slane %v395, 1
    %v430 = vrot.slane %v394, 2
    %v431 = vrot.slane %v395, 2
    %v432 = vrot.slane %v394, 3
    %v433 = vrot.slane %v395, 3
    %v434 = vrot.slane %v394, 4
    %v435 = vrot.slane %v395, 4
    %v436 = vrot.slane %v394, 5
    %v437 = vrot.slane %v395, 5
    %v438 = vrot.slane %v394, 6
    %v439 = vrot.slane %v395, 6
    %v440 = vrot.slane %v394, 7
    %v441 = vrot.slane %v395, 7
    %v442 = vrot.slane %v428, 7
    %v443 = vrot.slane %v429, 7
    %v444 = vrot.slane %v430, 7
    %v445 = vrot.slane %v431, 7
    %v446 = vrot.slane %v432, 7
    %v447 = vrot.slane %v433, 7
    %v448 = vrot.slane %v434, 7
    %v449 = vrot.slane %v435, 7
    %v450 = vrot.slane %v436, 7
    %v451 = vrot.slane %v437, 7
    %v452 = vrot.slane %v438, 7
    %v453 = vrot.slane %v439, 7
    %v454 = vrot.slane %v440, 7
    %v455 = vrot.slane %v441, 7
    %vm472 = vcmask 1040384
    %v473 = vsel %vm472, %v392, %v440
    %v474 = vsel %vm472, %v393, %v441
    %v475 = vsel %vm472, %v398, %v442
    %v476 = vsel %vm472, %v399, %v443
    %v477 = vsel %vm472, %v402, %v444
    %v478 = vsel %vm472, %v403, %v445
    %v479 = vsel %vm472, %v406, %v446
    %v480 = vsel %vm472, %v407, %v447
    %v481 = vsel %vm472, %v410, %v448
    %v482 = vsel %vm472, %v411, %v449
    %v483 = vsel %vm472, %v414, %v450
    %v484 = vsel %vm472, %v415, %v451
    %v485 = vsel %vm472, %v418, %v452
    %v486 = vsel %vm472, %v419, %v453
    %v487 = vsel %vm472, %v422, %v454
    %v488 = vsel %vm472, %v423, %v455
    %s489 = smul.u32 8, 4
    %s490 = smul.u32 %s489, 16
    %s491 = sshll.u32 %s490, 4
    %492 = dma.done [#allocation3], %s491
    %v493 = vld [vmem:[#allocation2] sm:$0xff]
    %v494 = vld [vmem:[#allocation2 + $0x8] sm:$0xff]
    %v495 = vld [vmem:[#allocation2 + $0x10] sm:$0xff]
    %v496 = vld [vmem:[#allocation2 + $0x18] sm:$0xff]
    %v497 = vld [vmem:[#allocation2 + $0x20] sm:$0xff]
    %v498 = vld [vmem:[#allocation2 + $0x28] sm:$0xff]
    %v499 = vld [vmem:[#allocation2 + $0x30] sm:$0xff]
    %v500 = vld [vmem:[#allocation2 + $0x38] sm:$0xff]
    %v501 = vld [vmem:[#allocation2 + $0x40] sm:$0xff]
    %v502 = vld [vmem:[#allocation2 + $0x48] sm:$0xff]
    %v503 = vld [vmem:[#allocation2 + $0x50] sm:$0xff]
    %v504 = vld [vmem:[#allocation2 + $0x58] sm:$0xff]
    %v505 = vld [vmem:[#allocation2 + $0x60] sm:$0xff]
    %v506 = vld [vmem:[#allocation2 + $0x68] sm:$0xff]
    %v507 = vld [vmem:[#allocation2 + $0x70] sm:$0xff]
    %v508 = vld [vmem:[#allocation2 + $0x78] sm:$0xff]
    %v509 = vld [vmem:[#allocation2 + $0x80] sm:$0xff]
    %v510 = vld [vmem:[#allocation2 + $0x88] sm:$0xff]
    %v511 = vld [vmem:[#allocation2 + $0x90] sm:$0xff]
    %v512 = vld [vmem:[#allocation2 + $0x98] sm:$0xff]
    %v513 = vld [vmem:[#allocation2 + $0xa0] sm:$0xff]
    %v514 = vld [vmem:[#allocation2 + $0xa8] sm:$0xff]
    %v515 = vld [vmem:[#allocation2 + $0xb0] sm:$0xff]
    %v516 = vld [vmem:[#allocation2 + $0xb8] sm:$0xff]
    %v517 = vld [vmem:[#allocation2 + $0xc0] sm:$0xff]
    %v518 = vld [vmem:[#allocation2 + $0xc8] sm:$0xff]
    %v519 = vld [vmem:[#allocation2 + $0xd0] sm:$0xff]
    %v520 = vld [vmem:[#allocation2 + $0xd8] sm:$0xff]
    %v521 = vld [vmem:[#allocation2 + $0xe0] sm:$0xff]
    %v522 = vld [vmem:[#allocation2 + $0xe8] sm:$0xff]
    %v523 = vld [vmem:[#allocation2 + $0xf0] sm:$0xff]
    %v524 = vld [vmem:[#allocation2 + $0xf8] sm:$0xff]
    %v525 = vld [vmem:[#allocation2 + $0x100] sm:$0xff]
    %v526 = vld [vmem:[#allocation2 + $0x108] sm:$0xff]
    %v527 = vld [vmem:[#allocation2 + $0x110] sm:$0xff]
    %v528 = vld [vmem:[#allocation2 + $0x118] sm:$0xff]
    %v529 = vld [vmem:[#allocation2 + $0x120] sm:$0xff]
    %v530 = vld [vmem:[#allocation2 + $0x128] sm:$0xff]
    %v531 = vld [vmem:[#allocation2 + $0x130] sm:$0xff]
    %v532 = vld [vmem:[#allocation2 + $0x138] sm:$0xff]
    %v533 = vld [vmem:[#allocation2 + $0x140] sm:$0xff]
    %v534 = vld [vmem:[#allocation2 + $0x148] sm:$0xff]
    %v535 = vld [vmem:[#allocation2 + $0x150] sm:$0xff]
    %v536 = vld [vmem:[#allocation2 + $0x158] sm:$0xff]
    %v537 = vld [vmem:[#allocation2 + $0x160] sm:$0xff]
    %v538 = vld [vmem:[#allocation2 + $0x168] sm:$0xff]
    %v539 = vld [vmem:[#allocation2 + $0x170] sm:$0xff]
    %v540 = vld [vmem:[#allocation2 + $0x178] sm:$0xff]
    %v541 = vld [vmem:[#allocation2 + $0x180] sm:$0xff]
    %v542 = vld [vmem:[#allocation2 + $0x188] sm:$0xff]
    %v543 = vld [vmem:[#allocation2 + $0x190] sm:$0xff]
    %v544 = vld [vmem:[#allocation2 + $0x198] sm:$0xff]
    %v545 = vld [vmem:[#allocation2 + $0x1a0] sm:$0xff]
    %v546 = vld [vmem:[#allocation2 + $0x1a8] sm:$0xff]
    %v547 = vld [vmem:[#allocation2 + $0x1b0] sm:$0xff]
    %v548 = vld [vmem:[#allocation2 + $0x1b8] sm:$0xff]
    %v549 = vld [vmem:[#allocation2 + $0x1c0] sm:$0xff]
    %v550 = vld [vmem:[#allocation2 + $0x1c8] sm:$0xff]
    %v551 = vld [vmem:[#allocation2 + $0x1d0] sm:$0xff]
    %v552 = vld [vmem:[#allocation2 + $0x1d8] sm:$0xff]
    %v553 = vld [vmem:[#allocation2 + $0x1e0] sm:$0xff]
    %v554 = vld [vmem:[#allocation2 + $0x1e8] sm:$0xff]
    %v555 = vld [vmem:[#allocation2 + $0x1f0] sm:$0xff]
    %v556 = vld [vmem:[#allocation2 + $0x1f8] sm:$0xff]
    %v557 = vld [vmem:[%s2 + $0x21] sm:$0x1]
    %v558 = vlaneseq
    %v559 = vshrl.u32 %v558, 7
    %v560 = vsub.s32 0, %v559
    %v561 = vrot.slane %v557, %v560
    %562 = vmatprep.subr.mxu0 0.0
    %563 = vmatpush1.xpose.msra.mxu0 0.0
    %564 = vmatprep.subr.mxu0 0.0
    %565 = vmatpush1.xpose.msra.mxu0 0.0
    %566 = vmatprep.subr.mxu0 0.0
    %567 = vmatpush1.xpose.msra.mxu0 0.0
    %568 = vmatprep.subr.mxu0 0.0
    %569 = vmatpush1.xpose.msra.mxu0 0.0
    %570 = vmatprep.subr.mxu0 0.0
    %571 = vmatpush1.xpose.msra.mxu0 0.0
    %572 = vmatprep.subr.mxu0 0.0
    %573 = vmatpush1.xpose.msra.mxu0 0.0
    %574 = vmatprep.subr.mxu0 0.0
    %575 = vmatpush1.xpose.msra.mxu0 0.0
    %576 = vmatprep.subr.mxu0 0.0
    %577 = vmatpush1.xpose.msra.mxu0 0.0
    %578 = vmatprep.subr.mxu0 0.0
    %579 = vmatpush1.xpose.msra.mxu0 0.0
    %580 = vmatprep.subr.mxu0 0.0
    %581 = vmatpush1.xpose.msra.mxu0 0.0
    %582 = vmatprep.subr.mxu0 0.0
    %583 = vmatpush1.xpose.msra.mxu0 0.0
    %584 = vmatprep.subr.mxu0 0.0
    %585 = vmatpush1.xpose.msra.mxu0 0.0
    %586 = vmatprep.subr.mxu0 %v542
    %587 = vmatpush1.xpose.msra.mxu0 %v541
    %588 = vmatprep.subr.mxu0 %v526
    %589 = vmatpush1.xpose.msra.mxu0 %v525
    %590 = vmatprep.subr.mxu0 %v510
    %591 = vmatpush1.xpose.msra.mxu0 %v509
    %592 = vmatprep.subr.mxu0 %v494
    %593 = vmatpush1.xpose.msra.mxu0 %v493
    %594 = vmatprep.subr.mxu0 0.0
    %595 = vmatpush2.xpose.msra.mxu0 0.0
    %596 = vmatprep.subr.mxu0 0.0
    %597 = vmatpush2.xpose.msra.mxu0 0.0
    %598 = vmatprep.subr.mxu0 0.0
    %599 = vmatpush2.xpose.msra.mxu0 0.0
    %600 = vmatprep.subr.mxu0 0.0
    %601 = vmatpush2.xpose.msra.mxu0 0.0
    %602 = vmatprep.subr.mxu0 0.0
    %603 = vmatpush2.xpose.msra.mxu0 0.0
    %604 = vmatprep.subr.mxu0 0.0
    %605 = vmatpush2.xpose.msra.mxu0 0.0
    %606 = vmatprep.subr.mxu0 0.0
    %607 = vmatpush2.xpose.msra.mxu0 0.0
    %608 = vmatprep.subr.mxu0 0.0
    %609 = vmatpush2.xpose.msra.mxu0 0.0
    %610 = vmatprep.subr.mxu0 0.0
    %611 = vmatpush2.xpose.msra.mxu0 0.0
    %612 = vmatprep.subr.mxu0 0.0
    %613 = vmatpush2.xpose.msra.mxu0 0.0
    %614 = vmatprep.subr.mxu0 0.0
    %615 = vmatpush2.xpose.msra.mxu0 0.0
    %616 = vmatprep.subr.mxu0 0.0
    %617 = vmatpush2.xpose.msra.mxu0 0.0
    %618 = vmatprep.subr.mxu0 0.0
    %619 = vmatpush2.xpose.msra.mxu0 0.0
    %620 = vmatprep.subr.mxu0 0.0
    %621 = vmatpush2.xpose.msra.mxu0 0.0
    %622 = vmatprep.subr.mxu0 0.0
    %623 = vmatpush2.xpose.msra.mxu0 0.0
    %624 = vmatprep.subr.mxu0 0.0
    %625 = vmatpush2.xpose.msra.mxu0 0.0
    %626 = vmatprep.mubr.f32.mxu0 %v474
    %627 = vmatmul.mubr.f32.gmra.mxu0 %v473
    %v628 = vpop.f32.mrf.mxu0
    %v629 = vadd.f32 %v561, %v628
    %v630 = vpop.f32.mrf.mxu0
    %631 = vdwg.mxu0
    %632 = vmatprep.subr.mxu0 0.0
    %633 = vmatpush1.xpose.msra.mxu0 0.0
    %634 = vmatprep.subr.mxu0 0.0
    %635 = vmatpush1.xpose.msra.mxu0 0.0
    %636 = vmatprep.subr.mxu0 0.0
    %637 = vmatpush1.xpose.msra.mxu0 0.0
    %638 = vmatprep.subr.mxu0 0.0
    %639 = vmatpush1.xpose.msra.mxu0 0.0
    %640 = vmatprep.subr.mxu0 0.0
    %641 = vmatpush1.xpose.msra.mxu0 0.0
    %642 = vmatprep.subr.mxu0 0.0
    %643 = vmatpush1.xpose.msra.mxu0 0.0
    %644 = vmatprep.subr.mxu0 0.0
    %645 = vmatpush1.xpose.msra.mxu0 0.0
    %646 = vmatprep.subr.mxu0 0.0
    %647 = vmatpush1.xpose.msra.mxu0 0.0
    %648 = vmatprep.subr.mxu0 0.0
    %649 = vmatpush1.xpose.msra.mxu0 0.0
    %650 = vmatprep.subr.mxu0 0.0
    %651 = vmatpush1.xpose.msra.mxu0 0.0
    %652 = vmatprep.subr.mxu0 0.0
    %653 = vmatpush1.xpose.msra.mxu0 0.0
    %654 = vmatprep.subr.mxu0 0.0
    %655 = vmatpush1.xpose.msra.mxu0 0.0
    %656 = vmatprep.subr.mxu0 %v544
    %657 = vmatpush1.xpose.msra.mxu0 %v543
    %658 = vmatprep.subr.mxu0 %v528
    %659 = vmatpush1.xpose.msra.mxu0 %v527
    %660 = vmatprep.subr.mxu0 %v512
    %661 = vmatpush1.xpose.msra.mxu0 %v511
    %662 = vmatprep.subr.mxu0 %v496
    %663 = vmatpush1.xpose.msra.mxu0 %v495
    %664 = vmatprep.subr.mxu0 0.0
    %665 = vmatpush2.xpose.msra.mxu0 0.0
    %666 = vmatprep.subr.mxu0 0.0
    %667 = vmatpush2.xpose.msra.mxu0 0.0
    %668 = vmatprep.subr.mxu0 0.0
    %669 = vmatpush2.xpose.msra.mxu0 0.0
    %670 = vmatprep.subr.mxu0 0.0
    %671 = vmatpush2.xpose.msra.mxu0 0.0
    %672 = vmatprep.subr.mxu0 0.0
    %673 = vmatpush2.xpose.msra.mxu0 0.0
    %674 = vmatprep.subr.mxu0 0.0
    %675 = vmatpush2.xpose.msra.mxu0 0.0
    %676 = vmatprep.subr.mxu0 0.0
    %677 = vmatpush2.xpose.msra.mxu0 0.0
    %678 = vmatprep.subr.mxu0 0.0
    %679 = vmatpush2.xpose.msra.mxu0 0.0
    %680 = vmatprep.subr.mxu0 0.0
    %681 = vmatpush2.xpose.msra.mxu0 0.0
    %682 = vmatprep.subr.mxu0 0.0
    %683 = vmatpush2.xpose.msra.mxu0 0.0
    %684 = vmatprep.subr.mxu0 0.0
    %685 = vmatpush2.xpose.msra.mxu0 0.0
    %686 = vmatprep.subr.mxu0 0.0
    %687 = vmatpush2.xpose.msra.mxu0 0.0
    %688 = vmatprep.subr.mxu0 0.0
    %689 = vmatpush2.xpose.msra.mxu0 0.0
    %690 = vmatprep.subr.mxu0 0.0
    %691 = vmatpush2.xpose.msra.mxu0 0.0
    %692 = vmatprep.subr.mxu0 0.0
    %693 = vmatpush2.xpose.msra.mxu0 0.0
    %694 = vmatprep.subr.mxu0 0.0
    %695 = vmatpush2.xpose.msra.mxu0 0.0
    %696 = vmatprep.mubr.f32.mxu0 %v476
    %697 = vmatmul.mubr.f32.gmra.mxu0 %v475
    %v698 = vpop.f32.mrf.mxu0
    %v699 = vadd.f32 %v629, %v698
    %v700 = vpop.f32.mrf.mxu0
    %701 = vdwg.mxu0
    %702 = vmatprep.subr.mxu0 0.0
    %703 = vmatpush1.xpose.msra.mxu0 0.0
    %704 = vmatprep.subr.mxu0 0.0
    %705 = vmatpush1.xpose.msra.mxu0 0.0
    %706 = vmatprep.subr.mxu0 0.0
    %707 = vmatpush1.xpose.msra.mxu0 0.0
    %708 = vmatprep.subr.mxu0 0.0
    %709 = vmatpush1.xpose.msra.mxu0 0.0
    %710 = vmatprep.subr.mxu0 0.0
    %711 = vmatpush1.xpose.msra.mxu0 0.0
    %712 = vmatprep.subr.mxu0 0.0
    %713 = vmatpush1.xpose.msra.mxu0 0.0
    %714 = vmatprep.subr.mxu0 0.0
    %715 = vmatpush1.xpose.msra.mxu0 0.0
    %716 = vmatprep.subr.mxu0 0.0
    %717 = vmatpush1.xpose.msra.mxu0 0.0
    %718 = vmatprep.subr.mxu0 0.0
    %719 = vmatpush1.xpose.msra.mxu0 0.0
    %720 = vmatprep.subr.mxu0 0.0
    %721 = vmatpush1.xpose.msra.mxu0 0.0
    %722 = vmatprep.subr.mxu0 0.0
    %723 = vmatpush1.xpose.msra.mxu0 0.0
    %724 = vmatprep.subr.mxu0 0.0
    %725 = vmatpush1.xpose.msra.mxu0 0.0
    %726 = vmatprep.subr.mxu0 %v546
    %727 = vmatpush1.xpose.msra.mxu0 %v545
    %728 = vmatprep.subr.mxu0 %v530
    %729 = vmatpush1.xpose.msra.mxu0 %v529
    %730 = vmatprep.subr.mxu0 %v514
    %731 = vmatpush1.xpose.msra.mxu0 %v513
    %732 = vmatprep.subr.mxu0 %v498
    %733 = vmatpush1.xpose.msra.mxu0 %v497
    %734 = vmatprep.subr.mxu0 0.0
    %735 = vmatpush2.xpose.msra.mxu0 0.0
    %736 = vmatprep.subr.mxu0 0.0
    %737 = vmatpush2.xpose.msra.mxu0 0.0
    %738 = vmatprep.subr.mxu0 0.0
    %739 = vmatpush2.xpose.msra.mxu0 0.0
    %740 = vmatprep.subr.mxu0 0.0
    %741 = vmatpush2.xpose.msra.mxu0 0.0
    %742 = vmatprep.subr.mxu0 0.0
    %743 = vmatpush2.xpose.msra.mxu0 0.0
    %744 = vmatprep.subr.mxu0 0.0
    %745 = vmatpush2.xpose.msra.mxu0 0.0
    %746 = vmatprep.subr.mxu0 0.0
    %747 = vmatpush2.xpose.msra.mxu0 0.0
    %748 = vmatprep.subr.mxu0 0.0
    %749 = vmatpush2.xpose.msra.mxu0 0.0
    %750 = vmatprep.subr.mxu0 0.0
    %751 = vmatpush2.xpose.msra.mxu0 0.0
    %752 = vmatprep.subr.mxu0 0.0
    %753 = vmatpush2.xpose.msra.mxu0 0.0
    %754 = vmatprep.subr.mxu0 0.0
    %755 = vmatpush2.xpose.msra.mxu0 0.0
    %756 = vmatprep.subr.mxu0 0.0
    %757 = vmatpush2.xpose.msra.mxu0 0.0
    %758 = vmatprep.subr.mxu0 0.0
    %759 = vmatpush2.xpose.msra.mxu0 0.0
    %760 = vmatprep.subr.mxu0 0.0
    %761 = vmatpush2.xpose.msra.mxu0 0.0
    %762 = vmatprep.subr.mxu0 0.0
    %763 = vmatpush2.xpose.msra.mxu0 0.0
    %764 = vmatprep.subr.mxu0 0.0
    %765 = vmatpush2.xpose.msra.mxu0 0.0
    %766 = vmatprep.mubr.f32.mxu0 %v478
    %767 = vmatmul.mubr.f32.gmra.mxu0 %v477
    %v768 = vpop.f32.mrf.mxu0
    %v769 = vadd.f32 %v699, %v768
    %v770 = vpop.f32.mrf.mxu0
    %771 = vdwg.mxu0
    %772 = vmatprep.subr.mxu0 0.0
    %773 = vmatpush1.xpose.msra.mxu0 0.0
    %774 = vmatprep.subr.mxu0 0.0
    %775 = vmatpush1.xpose.msra.mxu0 0.0
    %776 = vmatprep.subr.mxu0 0.0
    %777 = vmatpush1.xpose.msra.mxu0 0.0
    %778 = vmatprep.subr.mxu0 0.0
    %779 = vmatpush1.xpose.msra.mxu0 0.0
    %780 = vmatprep.subr.mxu0 0.0
    %781 = vmatpush1.xpose.msra.mxu0 0.0
    %782 = vmatprep.subr.mxu0 0.0
    %783 = vmatpush1.xpose.msra.mxu0 0.0
    %784 = vmatprep.subr.mxu0 0.0
    %785 = vmatpush1.xpose.msra.mxu0 0.0
    %786 = vmatprep.subr.mxu0 0.0
    %787 = vmatpush1.xpose.msra.mxu0 0.0
    %788 = vmatprep.subr.mxu0 0.0
    %789 = vmatpush1.xpose.msra.mxu0 0.0
    %790 = vmatprep.subr.mxu0 0.0
    %791 = vmatpush1.xpose.msra.mxu0 0.0
    %792 = vmatprep.subr.mxu0 0.0
    %793 = vmatpush1.xpose.msra.mxu0 0.0
    %794 = vmatprep.subr.mxu0 0.0
    %795 = vmatpush1.xpose.msra.mxu0 0.0
    %796 = vmatprep.subr.mxu0 %v548
    %797 = vmatpush1.xpose.msra.mxu0 %v547
    %798 = vmatprep.subr.mxu0 %v532
    %799 = vmatpush1.xpose.msra.mxu0 %v531
    %800 = vmatprep.subr.mxu0 %v516
    %801 = vmatpush1.xpose.msra.mxu0 %v515
    %802 = vmatprep.subr.mxu0 %v500
    %803 = vmatpush1.xpose.msra.mxu0 %v499
    %804 = vmatprep.subr.mxu0 0.0
    %805 = vmatpush2.xpose.msra.mxu0 0.0
    %806 = vmatprep.subr.mxu0 0.0
    %807 = vmatpush2.xpose.msra.mxu0 0.0
    %808 = vmatprep.subr.mxu0 0.0
    %809 = vmatpush2.xpose.msra.mxu0 0.0
    %810 = vmatprep.subr.mxu0 0.0
    %811 = vmatpush2.xpose.msra.mxu0 0.0
    %812 = vmatprep.subr.mxu0 0.0
    %813 = vmatpush2.xpose.msra.mxu0 0.0
    %814 = vmatprep.subr.mxu0 0.0
    %815 = vmatpush2.xpose.msra.mxu0 0.0
    %816 = vmatprep.subr.mxu0 0.0
    %817 = vmatpush2.xpose.msra.mxu0 0.0
    %818 = vmatprep.subr.mxu0 0.0
    %819 = vmatpush2.xpose.msra.mxu0 0.0
    %820 = vmatprep.subr.mxu0 0.0
    %821 = vmatpush2.xpose.msra.mxu0 0.0
    %822 = vmatprep.subr.mxu0 0.0
    %823 = vmatpush2.xpose.msra.mxu0 0.0
    %824 = vmatprep.subr.mxu0 0.0
    %825 = vmatpush2.xpose.msra.mxu0 0.0
    %826 = vmatprep.subr.mxu0 0.0
    %827 = vmatpush2.xpose.msra.mxu0 0.0
    %828 = vmatprep.subr.mxu0 0.0
    %829 = vmatpush2.xpose.msra.mxu0 0.0
    %830 = vmatprep.subr.mxu0 0.0
    %831 = vmatpush2.xpose.msra.mxu0 0.0
    %832 = vmatprep.subr.mxu0 0.0
    %833 = vmatpush2.xpose.msra.mxu0 0.0
    %834 = vmatprep.subr.mxu0 0.0
    %835 = vmatpush2.xpose.msra.mxu0 0.0
    %836 = vmatprep.mubr.f32.mxu0 %v480
    %837 = vmatmul.mubr.f32.gmra.mxu0 %v479
    %v838 = vpop.f32.mrf.mxu0
    %v839 = vadd.f32 %v769, %v838
    %v840 = vpop.f32.mrf.mxu0
    %841 = vdwg.mxu0
    %842 = vmatprep.subr.mxu0 0.0
    %843 = vmatpush1.xpose.msra.mxu0 0.0
    %844 = vmatprep.subr.mxu0 0.0
    %845 = vmatpush1.xpose.msra.mxu0 0.0
    %846 = vmatprep.subr.mxu0 0.0
    %847 = vmatpush1.xpose.msra.mxu0 0.0
    %848 = vmatprep.subr.mxu0 0.0
    %849 = vmatpush1.xpose.msra.mxu0 0.0
    %850 = vmatprep.subr.mxu0 0.0
    %851 = vmatpush1.xpose.msra.mxu0 0.0
    %852 = vmatprep.subr.mxu0 0.0
    %853 = vmatpush1.xpose.msra.mxu0 0.0
    %854 = vmatprep.subr.mxu0 0.0
    %855 = vmatpush1.xpose.msra.mxu0 0.0
    %856 = vmatprep.subr.mxu0 0.0
    %857 = vmatpush1.xpose.msra.mxu0 0.0
    %858 = vmatprep.subr.mxu0 0.0
    %859 = vmatpush1.xpose.msra.mxu0 0.0
    %860 = vmatprep.subr.mxu0 0.0
    %861 = vmatpush1.xpose.msra.mxu0 0.0
    %862 = vmatprep.subr.mxu0 0.0
    %863 = vmatpush1.xpose.msra.mxu0 0.0
    %864 = vmatprep.subr.mxu0 0.0
    %865 = vmatpush1.xpose.msra.mxu0 0.0
    %866 = vmatprep.subr.mxu0 %v550
    %867 = vmatpush1.xpose.msra.mxu0 %v549
    %868 = vmatprep.subr.mxu0 %v534
    %869 = vmatpush1.xpose.msra.mxu0 %v533
    %870 = vmatprep.subr.mxu0 %v518
    %871 = vmatpush1.xpose.msra.mxu0 %v517
    %872 = vmatprep.subr.mxu0 %v502
    %873 = vmatpush1.xpose.msra.mxu0 %v501
    %874 = vmatprep.subr.mxu0 0.0
    %875 = vmatpush2.xpose.msra.mxu0 0.0
    %876 = vmatprep.subr.mxu0 0.0
    %877 = vmatpush2.xpose.msra.mxu0 0.0
    %878 = vmatprep.subr.mxu0 0.0
    %879 = vmatpush2.xpose.msra.mxu0 0.0
    %880 = vmatprep.subr.mxu0 0.0
    %881 = vmatpush2.xpose.msra.mxu0 0.0
    %882 = vmatprep.subr.mxu0 0.0
    %883 = vmatpush2.xpose.msra.mxu0 0.0
    %884 = vmatprep.subr.mxu0 0.0
    %885 = vmatpush2.xpose.msra.mxu0 0.0
    %886 = vmatprep.subr.mxu0 0.0
    %887 = vmatpush2.xpose.msra.mxu0 0.0
    %888 = vmatprep.subr.mxu0 0.0
    %889 = vmatpush2.xpose.msra.mxu0 0.0
    %890 = vmatprep.subr.mxu0 0.0
    %891 = vmatpush2.xpose.msra.mxu0 0.0
    %892 = vmatprep.subr.mxu0 0.0
    %893 = vmatpush2.xpose.msra.mxu0 0.0
    %894 = vmatprep.subr.mxu0 0.0
    %895 = vmatpush2.xpose.msra.mxu0 0.0
    %896 = vmatprep.subr.mxu0 0.0
    %897 = vmatpush2.xpose.msra.mxu0 0.0
    %898 = vmatprep.subr.mxu0 0.0
    %899 = vmatpush2.xpose.msra.mxu0 0.0
    %900 = vmatprep.subr.mxu0 0.0
    %901 = vmatpush2.xpose.msra.mxu0 0.0
    %902 = vmatprep.subr.mxu0 0.0
    %903 = vmatpush2.xpose.msra.mxu0 0.0
    %904 = vmatprep.subr.mxu0 0.0
    %905 = vmatpush2.xpose.msra.mxu0 0.0
    %906 = vmatprep.mubr.f32.mxu0 %v482
    %907 = vmatmul.mubr.f32.gmra.mxu0 %v481
    %v908 = vpop.f32.mrf.mxu0
    %v909 = vadd.f32 %v839, %v908
    %v910 = vpop.f32.mrf.mxu0
    %911 = vdwg.mxu0
    %912 = vmatprep.subr.mxu0 0.0
    %913 = vmatpush1.xpose.msra.mxu0 0.0
    %914 = vmatprep.subr.mxu0 0.0
    %915 = vmatpush1.xpose.msra.mxu0 0.0
    %916 = vmatprep.subr.mxu0 0.0
    %917 = vmatpush1.xpose.msra.mxu0 0.0
    %918 = vmatprep.subr.mxu0 0.0
    %919 = vmatpush1.xpose.msra.mxu0 0.0
    %920 = vmatprep.subr.mxu0 0.0
    %921 = vmatpush1.xpose.msra.mxu0 0.0
    %922 = vmatprep.subr.mxu0 0.0
    %923 = vmatpush1.xpose.msra.mxu0 0.0
    %924 = vmatprep.subr.mxu0 0.0
    %925 = vmatpush1.xpose.msra.mxu0 0.0
    %926 = vmatprep.subr.mxu0 0.0
    %927 = vmatpush1.xpose.msra.mxu0 0.0
    %928 = vmatprep.subr.mxu0 0.0
    %929 = vmatpush1.xpose.msra.mxu0 0.0
    %930 = vmatprep.subr.mxu0 0.0
    %931 = vmatpush1.xpose.msra.mxu0 0.0
    %932 = vmatprep.subr.mxu0 0.0
    %933 = vmatpush1.xpose.msra.mxu0 0.0
    %934 = vmatprep.subr.mxu0 0.0
    %935 = vmatpush1.xpose.msra.mxu0 0.0
    %936 = vmatprep.subr.mxu0 %v552
    %937 = vmatpush1.xpose.msra.mxu0 %v551
    %938 = vmatprep.subr.mxu0 %v536
    %939 = vmatpush1.xpose.msra.mxu0 %v535
    %940 = vmatprep.subr.mxu0 %v520
    %941 = vmatpush1.xpose.msra.mxu0 %v519
    %942 = vmatprep.subr.mxu0 %v504
    %943 = vmatpush1.xpose.msra.mxu0 %v503
    %944 = vmatprep.subr.mxu0 0.0
    %945 = vmatpush2.xpose.msra.mxu0 0.0
    %946 = vmatprep.subr.mxu0 0.0
    %947 = vmatpush2.xpose.msra.mxu0 0.0
    %948 = vmatprep.subr.mxu0 0.0
    %949 = vmatpush2.xpose.msra.mxu0 0.0
    %950 = vmatprep.subr.mxu0 0.0
    %951 = vmatpush2.xpose.msra.mxu0 0.0
    %952 = vmatprep.subr.mxu0 0.0
    %953 = vmatpush2.xpose.msra.mxu0 0.0
    %954 = vmatprep.subr.mxu0 0.0
    %955 = vmatpush2.xpose.msra.mxu0 0.0
    %956 = vmatprep.subr.mxu0 0.0
    %957 = vmatpush2.xpose.msra.mxu0 0.0
    %958 = vmatprep.subr.mxu0 0.0
    %959 = vmatpush2.xpose.msra.mxu0 0.0
    %960 = vmatprep.subr.mxu0 0.0
    %961 = vmatpush2.xpose.msra.mxu0 0.0
    %962 = vmatprep.subr.mxu0 0.0
    %963 = vmatpush2.xpose.msra.mxu0 0.0
    %964 = vmatprep.subr.mxu0 0.0
    %965 = vmatpush2.xpose.msra.mxu0 0.0
    %966 = vmatprep.subr.mxu0 0.0
    %967 = vmatpush2.xpose.msra.mxu0 0.0
    %968 = vmatprep.subr.mxu0 0.0
    %969 = vmatpush2.xpose.msra.mxu0 0.0
    %970 = vmatprep.subr.mxu0 0.0
    %971 = vmatpush2.xpose.msra.mxu0 0.0
    %972 = vmatprep.subr.mxu0 0.0
    %973 = vmatpush2.xpose.msra.mxu0 0.0
    %974 = vmatprep.subr.mxu0 0.0
    %975 = vmatpush2.xpose.msra.mxu0 0.0
    %976 = vmatprep.mubr.f32.mxu0 %v484
    %977 = vmatmul.mubr.f32.gmra.mxu0 %v483
    %v978 = vpop.f32.mrf.mxu0
    %v979 = vadd.f32 %v909, %v978
    %v980 = vpop.f32.mrf.mxu0
    %981 = vdwg.mxu0
    %982 = vmatprep.subr.mxu0 0.0
    %983 = vmatpush1.xpose.msra.mxu0 0.0
    %984 = vmatprep.subr.mxu0 0.0
    %985 = vmatpush1.xpose.msra.mxu0 0.0
    %986 = vmatprep.subr.mxu0 0.0
    %987 = vmatpush1.xpose.msra.mxu0 0.0
    %988 = vmatprep.subr.mxu0 0.0
    %989 = vmatpush1.xpose.msra.mxu0 0.0
    %990 = vmatprep.subr.mxu0 0.0
    %991 = vmatpush1.xpose.msra.mxu0 0.0
    %992 = vmatprep.subr.mxu0 0.0
    %993 = vmatpush1.xpose.msra.mxu0 0.0
    %994 = vmatprep.subr.mxu0 0.0
    %995 = vmatpush1.xpose.msra.mxu0 0.0
    %996 = vmatprep.subr.mxu0 0.0
    %997 = vmatpush1.xpose.msra.mxu0 0.0
    %998 = vmatprep.subr.mxu0 0.0
    %999 = vmatpush1.xpose.msra.mxu0 0.0
    %1000 = vmatprep.subr.mxu0 0.0
    %1001 = vmatpush1.xpose.msra.mxu0 0.0
    %1002 = vmatprep.subr.mxu0 0.0
    %1003 = vmatpush1.xpose.msra.mxu0 0.0
    %1004 = vmatprep.subr.mxu0 0.0
    %1005 = vmatpush1.xpose.msra.mxu0 0.0
    %1006 = vmatprep.subr.mxu0 %v554
    %1007 = vmatpush1.xpose.msra.mxu0 %v553
    %1008 = vmatprep.subr.mxu0 %v538
    %1009 = vmatpush1.xpose.msra.mxu0 %v537
    %1010 = vmatprep.subr.mxu0 %v522
    %1011 = vmatpush1.xpose.msra.mxu0 %v521
    %1012 = vmatprep.subr.mxu0 %v506
    %1013 = vmatpush1.xpose.msra.mxu0 %v505
    %1014 = vmatprep.subr.mxu0 0.0
    %1015 = vmatpush2.xpose.msra.mxu0 0.0
    %1016 = vmatprep.subr.mxu0 0.0
    %1017 = vmatpush2.xpose.msra.mxu0 0.0
    %1018 = vmatprep.subr.mxu0 0.0
    %1019 = vmatpush2.xpose.msra.mxu0 0.0
    %1020 = vmatprep.subr.mxu0 0.0
    %1021 = vmatpush2.xpose.msra.mxu0 0.0
    %1022 = vmatprep.subr.mxu0 0.0
    %1023 = vmatpush2.xpose.msra.mxu0 0.0
    %1024 = vmatprep.subr.mxu0 0.0
    %1025 = vmatpush2.xpose.msra.mxu0 0.0
    %1026 = vmatprep.subr.mxu0 0.0
    %1027 = vmatpush2.xpose.msra.mxu0 0.0
    %1028 = vmatprep.subr.mxu0 0.0
    %1029 = vmatpush2.xpose.msra.mxu0 0.0
    %1030 = vmatprep.subr.mxu0 0.0
    %1031 = vmatpush2.xpose.msra.mxu0 0.0
    %1032 = vmatprep.subr.mxu0 0.0
    %1033 = vmatpush2.xpose.msra.mxu0 0.0
    %1034 = vmatprep.subr.mxu0 0.0
    %1035 = vmatpush2.xpose.msra.mxu0 0.0
    %1036 = vmatprep.subr.mxu0 0.0
    %1037 = vmatpush2.xpose.msra.mxu0 0.0
    %1038 = vmatprep.subr.mxu0 0.0
    %1039 = vmatpush2.xpose.msra.mxu0 0.0
    %1040 = vmatprep.subr.mxu0 0.0
    %1041 = vmatpush2.xpose.msra.mxu0 0.0
    %1042 = vmatprep.subr.mxu0 0.0
    %1043 = vmatpush2.xpose.msra.mxu0 0.0
    %1044 = vmatprep.subr.mxu0 0.0
    %1045 = vmatpush2.xpose.msra.mxu0 0.0
    %1046 = vmatprep.mubr.f32.mxu0 %v486
    %1047 = vmatmul.mubr.f32.gmra.mxu0 %v485
    %v1048 = vpop.f32.mrf.mxu0
    %v1049 = vadd.f32 %v979, %v1048
    %v1050 = vpop.f32.mrf.mxu0
    %1051 = vdwg.mxu0
    %1052 = vmatprep.subr.mxu0 0.0
    %1053 = vmatpush1.xpose.msra.mxu0 0.0
    %1054 = vmatprep.subr.mxu0 0.0
    %1055 = vmatpush1.xpose.msra.mxu0 0.0
    %1056 = vmatprep.subr.mxu0 0.0
    %1057 = vmatpush1.xpose.msra.mxu0 0.0
    %1058 = vmatprep.subr.mxu0 0.0
    %1059 = vmatpush1.xpose.msra.mxu0 0.0
    %1060 = vmatprep.subr.mxu0 0.0
    %1061 = vmatpush1.xpose.msra.mxu0 0.0
    %1062 = vmatprep.subr.mxu0 0.0
    %1063 = vmatpush1.xpose.msra.mxu0 0.0
    %1064 = vmatprep.subr.mxu0 0.0
    %1065 = vmatpush1.xpose.msra.mxu0 0.0
    %1066 = vmatprep.subr.mxu0 0.0
    %1067 = vmatpush1.xpose.msra.mxu0 0.0
    %1068 = vmatprep.subr.mxu0 0.0
    %1069 = vmatpush1.xpose.msra.mxu0 0.0
    %1070 = vmatprep.subr.mxu0 0.0
    %1071 = vmatpush1.xpose.msra.mxu0 0.0
    %1072 = vmatprep.subr.mxu0 0.0
    %1073 = vmatpush1.xpose.msra.mxu0 0.0
    %1074 = vmatprep.subr.mxu0 0.0
    %1075 = vmatpush1.xpose.msra.mxu0 0.0
    %1076 = vmatprep.subr.mxu0 %v556
    %1077 = vmatpush1.xpose.msra.mxu0 %v555
    %1078 = vmatprep.subr.mxu0 %v540
    %1079 = vmatpush1.xpose.msra.mxu0 %v539
    %1080 = vmatprep.subr.mxu0 %v524
    %1081 = vmatpush1.xpose.msra.mxu0 %v523
    %1082 = vmatprep.subr.mxu0 %v508
    %1083 = vmatpush1.xpose.msra.mxu0 %v507
    %1084 = vmatprep.subr.mxu0 0.0
    %1085 = vmatpush2.xpose.msra.mxu0 0.0
    %1086 = vmatprep.subr.mxu0 0.0
    %1087 = vmatpush2.xpose.msra.mxu0 0.0
    %1088 = vmatprep.subr.mxu0 0.0
    %1089 = vmatpush2.xpose.msra.mxu0 0.0
    %1090 = vmatprep.subr.mxu0 0.0
    %1091 = vmatpush2.xpose.msra.mxu0 0.0
    %1092 = vmatprep.subr.mxu0 0.0
    %1093 = vmatpush2.xpose.msra.mxu0 0.0
    %1094 = vmatprep.subr.mxu0 0.0
    %1095 = vmatpush2.xpose.msra.mxu0 0.0
    %1096 = vmatprep.subr.mxu0 0.0
    %1097 = vmatpush2.xpose.msra.mxu0 0.0
    %1098 = vmatprep.subr.mxu0 0.0
    %1099 = vmatpush2.xpose.msra.mxu0 0.0
    %1100 = vmatprep.subr.mxu0 0.0
    %1101 = vmatpush2.xpose.msra.mxu0 0.0
    %1102 = vmatprep.subr.mxu0 0.0
    %1103 = vmatpush2.xpose.msra.mxu0 0.0
    %1104 = vmatprep.subr.mxu0 0.0
    %1105 = vmatpush2.xpose.msra.mxu0 0.0
    %1106 = vmatprep.subr.mxu0 0.0
    %1107 = vmatpush2.xpose.msra.mxu0 0.0
    %1108 = vmatprep.subr.mxu0 0.0
    %1109 = vmatpush2.xpose.msra.mxu0 0.0
    %1110 = vmatprep.subr.mxu0 0.0
    %1111 = vmatpush2.xpose.msra.mxu0 0.0
    %1112 = vmatprep.subr.mxu0 0.0
    %1113 = vmatpush2.xpose.msra.mxu0 0.0
    %1114 = vmatprep.subr.mxu0 0.0
    %1115 = vmatpush2.xpose.msra.mxu0 0.0
    %1116 = vmatprep.mubr.f32.mxu0 %v488
    %1117 = vmatmul.mubr.f32.gmra.mxu0 %v487
    %v1118 = vpop.f32.mrf.mxu0
    %v1119 = vadd.f32 %v1049, %v1118
    %v1120 = vpop.f32.mrf.mxu0
    %1121 = vdwg.mxu0
    %v1122 = vmax.f32 %v1119, 0.0
    %v1123 = vld [vmem:[%s2] sm:$0xff]
    %v1124 = vld [vmem:[%s2 + $0x8] sm:$0xff]
    %v1125 = vld [vmem:[%s2 + $0x10] sm:$0xff]
    %v1126 = vld [vmem:[%s2 + $0x18] sm:$0xff]
    %v1127 = vld [vmem:[%s2 + $0x20] sm:$0x1]
    %v1128 = vlaneseq
    %v1129 = vshrl.u32 %v1128, 7
    %v1130 = vsub.s32 0, %v1129
    %v1131 = vrot.slane %v1127, %v1130
    %vm1132 = vcmask 261120
    %v1134 = vsel %vm1132, %v1122, 0
    %1136 = vmatprep.subr.mxu0 0.0
    %1137 = vmatpush1.msra.mxu0 0.0
    %1138 = vmatprep.subr.mxu0 0.0
    %1139 = vmatpush1.msra.mxu0 0.0
    %1140 = vmatprep.subr.mxu0 0.0
    %1141 = vmatpush1.msra.mxu0 0.0
    %1142 = vmatprep.subr.mxu0 0.0
    %1143 = vmatpush1.msra.mxu0 0.0
    %1144 = vmatprep.subr.mxu0 0.0
    %1145 = vmatpush1.msra.mxu0 0.0
    %1146 = vmatprep.subr.mxu0 0.0
    %1147 = vmatpush1.msra.mxu0 0.0
    %1148 = vmatprep.subr.mxu0 0.0
    %1149 = vmatpush1.msra.mxu0 0.0
    %1150 = vmatprep.subr.mxu0 0.0
    %1151 = vmatpush1.msra.mxu0 0.0
    %1152 = vmatprep.subr.mxu0 0.0
    %1153 = vmatpush1.msra.mxu0 0.0
    %1154 = vmatprep.subr.mxu0 0.0
    %1155 = vmatpush1.msra.mxu0 0.0
    %1156 = vmatprep.subr.mxu0 0.0
    %1157 = vmatpush1.msra.mxu0 0.0
    %1158 = vmatprep.subr.mxu0 0.0
    %1159 = vmatpush1.msra.mxu0 0.0
    %1160 = vmatprep.subr.mxu0 0.0
    %1161 = vmatpush1.msra.mxu0 %v1126
    %1162 = vmatprep.subr.mxu0 0.0
    %1163 = vmatpush1.msra.mxu0 %v1125
    %1164 = vmatprep.subr.mxu0 0.0
    %1165 = vmatpush1.msra.mxu0 %v1124
    %1166 = vmatprep.subr.mxu0 0.0
    %1167 = vmatpush1.msra.mxu0 %v1123
    %1168 = vmatprep.subr.mxu0 0.0
    %1169 = vmatpush2.msra.mxu0 0.0
    %1170 = vmatprep.subr.mxu0 0.0
    %1171 = vmatpush2.msra.mxu0 0.0
    %1172 = vmatprep.subr.mxu0 0.0
    %1173 = vmatpush2.msra.mxu0 0.0
    %1174 = vmatprep.subr.mxu0 0.0
    %1175 = vmatpush2.msra.mxu0 0.0
    %1176 = vmatprep.subr.mxu0 0.0
    %1177 = vmatpush2.msra.mxu0 0.0
    %1178 = vmatprep.subr.mxu0 0.0
    %1179 = vmatpush2.msra.mxu0 0.0
    %1180 = vmatprep.subr.mxu0 0.0
    %1181 = vmatpush2.msra.mxu0 0.0
    %1182 = vmatprep.subr.mxu0 0.0
    %1183 = vmatpush2.msra.mxu0 0.0
    %1184 = vmatprep.subr.mxu0 0.0
    %1185 = vmatpush2.msra.mxu0 0.0
    %1186 = vmatprep.subr.mxu0 0.0
    %1187 = vmatpush2.msra.mxu0 0.0
    %1188 = vmatprep.subr.mxu0 0.0
    %1189 = vmatpush2.msra.mxu0 0.0
    %1190 = vmatprep.subr.mxu0 0.0
    %1191 = vmatpush2.msra.mxu0 0.0
    %1192 = vmatprep.subr.mxu0 0.0
    %1193 = vmatpush2.msra.mxu0 0.0
    %1194 = vmatprep.subr.mxu0 0.0
    %1195 = vmatpush2.msra.mxu0 0.0
    %1196 = vmatprep.subr.mxu0 0.0
    %1197 = vmatpush2.msra.mxu0 0.0
    %1198 = vmatprep.subr.mxu0 0.0
    %1199 = vmatpush2.msra.mxu0 0.0
    %1200 = vmatprep.mubr.f32.mxu0 0.0
    %1201 = vmatmul.mubr.f32.gmra.mxu0 %v1134
    %v1202 = vpop.f32.mrf.mxu0
    %v1203 = vadd.f32 %v1131, %v1202
    %v1204 = vpop.f32.mrf.mxu0
    %1205 = vdwg.mxu0
    %vm1206 = vcmask 74752
    %1207 = vst.msk [vmem:[#allocation4] sm:$0x3] %vm1206, %v1203
    // Predicated region
    $region48: #{neural_network_forward.1} parent=1 // pred_check
      _
    $region49: #{neural_network_forward.1} parent=1 // pred_check_branch
      %1209 = sbr.rel (0) target = $region51
    $region50: #{neural_network_forward.1} parent=1 // pred_region
      %s1211 = ssub.s32 32, 32
      %1212 = vsyncadd [#allocation5], %s1211
      %s1214 = sshll.u32 [#allocation4], 4
      %s1215 = int_to_ptr.vmem [resolvable:$true] %s1214
      %1217 = dma.vmem_to_hbm [thread:$0]  %s1215, 32, %s4, [#allocation5]
    $region51: #{neural_network_forward.1} parent=1 // pred_fallthru
      _
    // Predicated region
    $region52: #{neural_network_forward.1} parent=1 // pred_check
      _
    $region53: #{neural_network_forward.1} parent=1 // pred_check_branch
      %1219 = sbr.rel (0) target = $region55
    $region54: #{neural_network_forward.1} parent=1 // pred_region
      %1220 = dma.done [#allocation5], 32
    $region55: #{neural_network_forward.1} parent=1 // pred_fallthru
      _
    %1221 = vsyncpa [#allocation5], 1
  %1222 = vsyncmov [#allocation3]
  %s1223 = vpop.sfrf %1222
  %p1224 = scmp.eq.s32.totalorder %s1223, 0
  %p1225 = pneg %p1224
  %1227 = shalt.err (%p1225)

</llo_original>
